<compile_context>
chip_gen: v7x
topology: tpu7x:2x2x1
jax: 0.10.0
libtpu: 0.0.40
codegen_flags: <defaults>
</compile_context>

<pallas_src>
import jax
import jax.numpy as jnp
from jax.experimental import pallas as pl
from jax.experimental.pallas import tpu as pltpu

IN_DIM = 3       # len(params)
HID_DIM = 16
OUT_DIM = 4      # len(action_list)

# Packed weight-slab layout (row starts sublane(8)-aligned):
#   rows [ 0,  3): w1.T  (3, 16)
#   row    8     : b1    (16,)
#   rows [16, 32): w2.T  (16, 4) in cols [0, 4)
#   row   32     : b2    (4,)   in cols [0, 4)
_W1_ROW = 0
_B1_ROW = 8
_W2_ROW = 16
_B2_ROW = 32
SLAB_ROWS = 40            # multiple of 8
SLAB_COLS = HID_DIM       # 16


def _round_up(n, m):
    return (n + m - 1) // m * m


def _rewardf_kernel(x_ref, w_ref, o_ref):
    """Fused MLP: o = relu(x @ W1 + b1) @ W2 + b2, all operands in VMEM."""
    x = x_ref[...]                                            # (bt, 3)
    b1 = w_ref[_B1_ROW:_B1_ROW + 1, :]                        # (1, 16)
    w2 = w_ref[_W2_ROW:_W2_ROW + HID_DIM, :OUT_DIM]           # (16, 4)
    b2 = w_ref[_B2_ROW:_B2_ROW + 1, :OUT_DIM]                 # (1, 4)

    # fc1 as VPU broadcast-FMA (K=3 is too small to bother the MXU with).
    h = b1
    for k in range(IN_DIM):
        h = h + x[:, k:k + 1] * w_ref[_W1_ROW + k:_W1_ROW + k + 1, :]
    h = jnp.maximum(h, 0.0)                                   # ReLU, (bt, 16)

    # fc2 on the MXU; (bt, 4) result stored directly into the narrow output.
    o_ref[...] = jnp.dot(h, w2, preferred_element_type=jnp.float32) + b2


def prepare_params(w1, b1, w2, b2):
    """Pack fc1/fc2 params into one pre-padded (SLAB_ROWS, SLAB_COLS) f32 slab.

    Call ONCE at init (outside the hot path) and reuse the result for every
    rewardf_forward call.  w1: (16, 3), b1: (16,), w2: (4, 16), b2: (4,)
    (torch.nn.Linear conventions)."""
    slab = jnp.zeros((SLAB_ROWS, SLAB_COLS), jnp.float32)
    slab = slab.at[_W1_ROW:_W1_ROW + IN_DIM, :HID_DIM].set(
        jnp.asarray(w1, jnp.float32).T)
    slab = slab.at[_B1_ROW, :HID_DIM].set(jnp.asarray(b1, jnp.float32))
    slab = slab.at[_W2_ROW:_W2_ROW + HID_DIM, :OUT_DIM].set(
        jnp.asarray(w2, jnp.float32).T)
    slab = slab.at[_B2_ROW, :OUT_DIM].set(jnp.asarray(b2, jnp.float32))
    return slab


def rewardf_forward(x, w_slab, *, batch_tile=1024):
    """x: (B, 3), w_slab: output of prepare_params().  Returns (B, 4) f32."""
    B = x.shape[0]
    assert x.shape[1] == IN_DIM
    x = x.astype(jnp.float32)

    # Tile selection: minimize padded rows, keep the sublane dim a multiple of 8.
    max_tile = max(8, _round_up(int(batch_tile), 8))
    b8 = _round_up(B, 8)
    if b8 <= max_tile:
        bt = b8                                    # single (possibly partial) block
    else:
        n = -(-B // max_tile)                      # blocks needed at max tile
        bt = _round_up(-(-B // n), 8)              # balanced tile, minimal padding
    n_blocks = -(-B // bt)

    # Split across TensorCores only when there is actually more than one block.
    dim_sem = ("parallel",) if n_blocks > 1 else ("arbitrary",)

    return pl.pallas_call(
        _rewardf_kernel,
        out_shape=jax.ShapeDtypeStruct((B, OUT_DIM), jnp.float32),
        grid=(n_blocks,),
        in_specs=[
            # Unpadded activations: last dim (3) equals the full array dim.
            pl.BlockSpec((bt, IN_DIM), lambda i: (i, 0)),
            # Constant index_map -> weight slab stays resident in VMEM.
            pl.BlockSpec((SLAB_ROWS, SLAB_COLS), lambda i: (0, 0)),
        ],
        # Narrow output block: last dim (4) equals the full array dim.
        out_specs=pl.BlockSpec((bt, OUT_DIM), lambda i: (i, 0)),
        compiler_params=pltpu.CompilerParams(dimension_semantics=dim_sem),
    )(x, w_slab)


def init_params(key):
    """Deterministic init matching nn.Linear's U(-1/sqrt(fan_in), 1/sqrt(fan_in))."""
    k1, k2, k3, k4 = jax.random.split(key, 4)
    bound1 = 1.0 / jnp.sqrt(jnp.float32(IN_DIM))
    bound2 = 1.0 / jnp.sqrt(jnp.float32(HID_DIM))
    w1 = jax.random.uniform(k1, (HID_DIM, IN_DIM), jnp.float32, -bound1, bound1)
    b1 = jax.random.uniform(k2, (HID_DIM,), jnp.float32, -bound1, bound1)
    w2 = jax.random.uniform(k3, (OUT_DIM, HID_DIM), jnp.float32, -bound2, bound2)
    b2 = jax.random.uniform(k4, (OUT_DIM,), jnp.float32, -bound2, bound2)
    return w1, b1, w2, b2


def _reference(x, w1, b1, w2, b2):
    return jnp.maximum(x @ w1.T + b1, 0.0) @ w2.T + b2


if __name__ == "__main__":
    key = jax.random.PRNGKey(0)
    k_x1, k_x2, k_par = jax.random.split(key, 3)

    w1, b1, w2, b2 = init_params(k_par)
    # Hoisted out of the per-call path: pack weights once, reuse forever.
    w_slab = prepare_params(w1, b1, w2, b2)

    # Small inference-style batch (the DQN action-selection path).
    x_small = jax.random.normal(k_x1, (2, IN_DIM), jnp.float32)
    out_small = rewardf_forward(x_small, w_slab)
    jax.block_until_ready(out_small)
    ref_small = _reference(x_small, w1, b1, w2, b2)
    assert out_small.shape == (2, OUT_DIM)
    assert jnp.allclose(out_small, ref_small, atol=1e-5, rtol=1e-5)

    # Larger, non-multiple-of-8 batch: single 304-row block (minimal padding).
    x_big = jax.random.normal(k_x2, (300, IN_DIM), jnp.float32)
    out_big = rewardf_forward(x_big, w_slab)
    jax.block_until_ready(out_big)
    ref_big = _reference(x_big, w1, b1, w2, b2)
    assert out_big.shape == (300, OUT_DIM)
    assert jnp.allclose(out_big, ref_big, atol=1e-4, rtol=1e-4)

    # Multi-block grid path (parallel batch tiles, partial last block).
    out_multi = rewardf_forward(x_big, w_slab, batch_tile=64)
    jax.block_until_ready(out_multi)
    assert jnp.allclose(out_multi, ref_big, atol=1e-4, rtol=1e-4)

    print("KERNEL_OK")
</pallas_src>

<mosaic_0001>
module attributes {stable_mosaic.version = 11 : i64} {
  func.func @_rewardf_kernel(%arg0: i32, %arg1: memref<8x3xf32, #tpu.memory_space<vmem>>, %arg2: memref<40x16xf32, #tpu.memory_space<vmem>>, %arg3: memref<8x4xf32, #tpu.memory_space<vmem>>) attributes {dimension_semantics = [#tpu.dimension_semantics<arbitrary>], iteration_bounds = array<i64: 1>, scalar_prefetch = 0 : i64, scratch_operands = 0 : i64, tpu.core_type = #tpu.core_type<tc>, window_params = [{transform_indices = @transform_0, window_bounds = array<i64: 8, 3>}, {pipeline_mode = #tpu.pipeline_mode<synchronous>, transform_indices = @transform_1, window_bounds = array<i64: 40, 16>}, {transform_indices = @transform_2, window_bounds = array<i64: 8, 4>}]} {
    %c0 = arith.constant 0 : index
    %c0_0 = arith.constant 0 : index
    %0 = vector.load %arg1[%c0, %c0_0] : memref<8x3xf32, #tpu.memory_space<vmem>>, vector<8x3xf32>
    %c8 = arith.constant 8 : index
    %c0_1 = arith.constant 0 : index
    %1 = vector.load %arg2[%c8, %c0_1] : memref<40x16xf32, #tpu.memory_space<vmem>>, vector<1x16xf32>
    %c16 = arith.constant 16 : index
    %c0_2 = arith.constant 0 : index
    %2 = vector.load %arg2[%c16, %c0_2] : memref<40x16xf32, #tpu.memory_space<vmem>>, vector<16x4xf32>
    %c32 = arith.constant 32 : index
    %c0_3 = arith.constant 0 : index
    %3 = vector.load %arg2[%c32, %c0_3] : memref<40x16xf32, #tpu.memory_space<vmem>>, vector<1x4xf32>
    %4 = vector.extract_strided_slice %0 {offsets = [0, 0], sizes = [8, 1], strides = [1, 1]} : vector<8x3xf32> to vector<8x1xf32>
    %c0_4 = arith.constant 0 : index
    %c0_5 = arith.constant 0 : index
    %5 = vector.load %arg2[%c0_4, %c0_5] : memref<40x16xf32, #tpu.memory_space<vmem>>, vector<1x16xf32>
    %6 = vector.broadcast %4 : vector<8x1xf32> to vector<8x16xf32>
    %7 = vector.broadcast %5 : vector<1x16xf32> to vector<8x16xf32>
    %8 = arith.mulf %6, %7 : vector<8x16xf32>
    %9 = vector.broadcast %1 : vector<1x16xf32> to vector<8x16xf32>
    %10 = arith.addf %9, %8 : vector<8x16xf32>
    %11 = vector.extract_strided_slice %0 {offsets = [0, 1], sizes = [8, 1], strides = [1, 1]} : vector<8x3xf32> to vector<8x1xf32>
    %c1 = arith.constant 1 : index
    %c0_6 = arith.constant 0 : index
    %12 = vector.load %arg2[%c1, %c0_6] : memref<40x16xf32, #tpu.memory_space<vmem>>, vector<1x16xf32>
    %13 = vector.broadcast %11 : vector<8x1xf32> to vector<8x16xf32>
    %14 = vector.broadcast %12 : vector<1x16xf32> to vector<8x16xf32>
    %15 = arith.mulf %13, %14 : vector<8x16xf32>
    %16 = arith.addf %10, %15 : vector<8x16xf32>
    %17 = vector.extract_strided_slice %0 {offsets = [0, 2], sizes = [8, 1], strides = [1, 1]} : vector<8x3xf32> to vector<8x1xf32>
    %c2 = arith.constant 2 : index
    %c0_7 = arith.constant 0 : index
    %18 = vector.load %arg2[%c2, %c0_7] : memref<40x16xf32, #tpu.memory_space<vmem>>, vector<1x16xf32>
    %19 = vector.broadcast %17 : vector<8x1xf32> to vector<8x16xf32>
    %20 = vector.broadcast %18 : vector<1x16xf32> to vector<8x16xf32>
    %21 = arith.mulf %19, %20 : vector<8x16xf32>
    %22 = arith.addf %16, %21 : vector<8x16xf32>
    %cst = arith.constant 0.000000e+00 : f32
    %23 = vector.broadcast %cst : f32 to vector<8x16xf32>
    %24 = arith.maximumf %22, %23 : vector<8x16xf32>
    %cst_8 = arith.constant dense<0.000000e+00> : vector<8x4xf32>
    %25 = tpu.matmul %24, %2, %cst_8 {dimension_numbers = #tpu.dot_dimension_numbers<[1], [0], [0], [1], [0, 0, 1, 1], [], []>} : vector<8x16xf32>, vector<16x4xf32>, vector<8x4xf32> -> vector<8x4xf32>
    %26 = vector.broadcast %3 : vector<1x4xf32> to vector<8x4xf32>
    %27 = arith.addf %25, %26 : vector<8x4xf32>
    %c0_9 = arith.constant 0 : index
    %c0_10 = arith.constant 0 : index
    %28 = vector.load %arg3[%c0_9, %c0_10] : memref<8x4xf32, #tpu.memory_space<vmem>>, vector<8x4xf32>
    tpu.vector_store %arg3[%c0_9, %c0_10], %27 {strides = array<i32>} : memref<8x4xf32, #tpu.memory_space<vmem>>, vector<8x4xf32>,
    return
  }
  func.func @transform_0(%arg0: i32) -> (i32, i32) {
    %c0_i32 = arith.constant 0 : i32
    %c0_i32_0 = arith.constant 0 : i32
    return %arg0, %c0_i32 : i32, i32
  }
  func.func @transform_1(%arg0: i32) -> (i32, i32) {
    %c0_i32 = arith.constant 0 : i32
    %c0_i32_0 = arith.constant 0 : i32
    %c0_i32_1 = arith.constant 0 : i32
    return %c0_i32, %c0_i32_0 : i32, i32
  }
  func.func @transform_2(%arg0: i32) -> (i32, i32) {
    %c0_i32 = arith.constant 0 : i32
    %c0_i32_0 = arith.constant 0 : i32
    return %arg0, %c0_i32 : i32, i32
  }
}

</mosaic_0001>

<llo_original>
// kernel: tpu_custom_call.1
$region0: #{tpu_custom_call.1}
  #allocation0 [shape = 'u32[]', space=smem, size = 0x4, offset = 0x4, fixed_abs, tag = 'smem constant byte address 0x4 - core index']
  #allocation1 [shape = 'u32[144,128]{1,0:T(1,128)}', space=vmem, size = 0x12000, scoped, tag = 'internal scratch']
  %s0 = inlined_call_operand.vmem [shape: f32[2,3], index: 0, kind: input, shape index: {}]
  %s1 = inlined_call_operand.vmem [shape: f32[40,16], index: 1, kind: input, shape index: {}]
  %s2 = inlined_call_operand.hbm [shape: f32[2,4], index: 2, kind: output, shape index: {}]
  %s3 = sld [smem:[#allocation0]]
  $region18: #{tpu_custom_call.1} parent=0
    _
  %s5 = ssub.s32 1, %s3
  %s6 = scalar_select 0, %s5, %s3
  $region1: #{tpu_custom_call.1} parent=0
    #allocation2 [shape = 'u8[4096]{0}', space=vmem, size = 0x1000, scoped, tag = 'output window, operand 0, single buffered']
    #allocation3 [shape = 's32[1]{0}', space=sflag, size = 0x4, scoped, tag = 'scoped memory for tpu_custom_call.1']
    %7 = vsyncpa [#allocation3], 0
    // Predicated region
    $region2: #{tpu_custom_call.1} parent=1 // pred_check
      _
    $region3: #{tpu_custom_call.1} parent=1 // pred_check_branch
      %9 = sbr.rel (0) target = $region5
    $region4: #{tpu_custom_call.1} parent=1 // pred_region
      _
    $region5: #{tpu_custom_call.1} parent=1 // pred_fallthru
      _
    // Predicated region
    $region6: #{tpu_custom_call.1} parent=1 // pred_check
      _
    $region7: #{tpu_custom_call.1} parent=1 // pred_check_branch
      %11 = sbr.rel (0) target = $region9
    $region8: #{tpu_custom_call.1} parent=1 // pred_region
      _
    $region9: #{tpu_custom_call.1} parent=1 // pred_fallthru
      _
    %v12 = vld [vmem:[%s0] sm:$0xff]
    %v13 = vld [vmem:[%s1 + $0x8] sm:$0x1]
    %v14 = vld [vmem:[%s1 + $0x10] sm:$0xff]
    %v15 = vld [vmem:[%s1 + $0x18] sm:$0xff]
    %v16 = vld [vmem:[%s1 + $0x20] sm:$0x1]
    %v17 = vld [vmem:[%s1] sm:$0x1]
    %19 = vset.pattern.permute.xlu0 0
    %20 = vperm.xlu0 %19, %v12
    %v21 = vpop.permute.xlu0 %20
    %v23 = vlaneseq
    %v24 = vshrl.u32 %v23, 7
    %v25 = vsub.s32 0, %v24
    %v26 = vrot.slane %v17, %v25
    %v27 = vmul.f32 %v21, %v26
    %v28 = vlaneseq
    %v29 = vshrl.u32 %v28, 7
    %v30 = vsub.s32 0, %v29
    %v31 = vrot.slane %v13, %v30
    %v32 = vadd.f32 %v31, %v27
    %v33 = vld [vmem:[%s1 + $0x1] sm:$0x1]
    %34 = vset.pattern.permute.xlu0 1
    %35 = vperm.xlu0 %34, %v12
    %v36 = vpop.permute.xlu0 %35
    %v38 = vlaneseq
    %v39 = vshrl.u32 %v38, 7
    %v40 = vsub.s32 0, %v39
    %v41 = vrot.slane %v33, %v40
    %v42 = vmul.f32 %v36, %v41
    %v43 = vadd.f32 %v32, %v42
    %v44 = vld [vmem:[%s1 + $0x2] sm:$0x1]
    %45 = vset.pattern.permute.xlu0 2
    %46 = vperm.xlu0 %45, %v12
    %v47 = vpop.permute.xlu0 %46
    %v49 = vlaneseq
    %v50 = vshrl.u32 %v49, 7
    %v51 = vsub.s32 0, %v50
    %v52 = vrot.slane %v44, %v51
    %v53 = vmul.f32 %v47, %v52
    %v54 = vadd.f32 %v43, %v53
    %v55 = vmax.f32 %v54, 0.0
    %v56 = vlaneseq
    %v57 = vshrl.u32 %v56, 7
    %v58 = vsub.s32 0, %v57
    %v59 = vrot.slane %v16, %v58
    %vm60 = vcmask 130048
    %v62 = vsel %vm60, %v55, 0
    %64 = vmatprep.subr.mxu0 0.0
    %65 = vmatpush1.msra.mxu0 %v14
    %66 = vmatprep.subr.mxu0 0.0
    %67 = vmatpush1.msra.mxu0 %v15
    %68 = vmatprep.subr.mxu0 0.0
    %69 = vmatpush1.msra.mxu0 0.0
    %70 = vmatprep.subr.mxu0 0.0
    %71 = vmatpush1.msra.mxu0 0.0
    %72 = vmatprep.subr.mxu0 0.0
    %73 = vmatpush1.msra.mxu0 0.0
    %74 = vmatprep.subr.mxu0 0.0
    %75 = vmatpush1.msra.mxu0 0.0
    %76 = vmatprep.subr.mxu0 0.0
    %77 = vmatpush1.msra.mxu0 0.0
    %78 = vmatprep.subr.mxu0 0.0
    %79 = vmatpush1.msra.mxu0 0.0
    %80 = vmatprep.subr.mxu0 0.0
    %81 = vmatpush1.msra.mxu0 0.0
    %82 = vmatprep.subr.mxu0 0.0
    %83 = vmatpush1.msra.mxu0 0.0
    %84 = vmatprep.subr.mxu0 0.0
    %85 = vmatpush1.msra.mxu0 0.0
    %86 = vmatprep.subr.mxu0 0.0
    %87 = vmatpush1.msra.mxu0 0.0
    %88 = vmatprep.subr.mxu0 0.0
    %89 = vmatpush1.msra.mxu0 0.0
    %90 = vmatprep.subr.mxu0 0.0
    %91 = vmatpush1.msra.mxu0 0.0
    %92 = vmatprep.subr.mxu0 0.0
    %93 = vmatpush1.msra.mxu0 0.0
    %94 = vmatprep.subr.mxu0 0.0
    %95 = vmatpush1.msra.mxu0 0.0
    %96 = vmatprep.subr.mxu0 0.0
    %97 = vmatpush1.msra.mxu0 0.0
    %98 = vmatprep.subr.mxu0 0.0
    %99 = vmatpush1.msra.mxu0 0.0
    %100 = vmatprep.subr.mxu0 0.0
    %101 = vmatpush1.msra.mxu0 0.0
    %102 = vmatprep.subr.mxu0 0.0
    %103 = vmatpush1.msra.mxu0 0.0
    %104 = vmatprep.subr.mxu0 0.0
    %105 = vmatpush1.msra.mxu0 0.0
    %106 = vmatprep.subr.mxu0 0.0
    %107 = vmatpush1.msra.mxu0 0.0
    %108 = vmatprep.subr.mxu0 0.0
    %109 = vmatpush1.msra.mxu0 0.0
    %110 = vmatprep.subr.mxu0 0.0
    %111 = vmatpush1.msra.mxu0 0.0
    %112 = vmatprep.subr.mxu0 0.0
    %113 = vmatpush1.msra.mxu0 0.0
    %114 = vmatprep.subr.mxu0 0.0
    %115 = vmatpush1.msra.mxu0 0.0
    %116 = vmatprep.subr.mxu0 0.0
    %117 = vmatpush1.msra.mxu0 0.0
    %118 = vmatprep.subr.mxu0 0.0
    %119 = vmatpush1.msra.mxu0 0.0
    %120 = vmatprep.subr.mxu0 0.0
    %121 = vmatpush1.msra.mxu0 0.0
    %122 = vmatprep.subr.mxu0 0.0
    %123 = vmatpush1.msra.mxu0 0.0
    %124 = vmatprep.subr.mxu0 0.0
    %125 = vmatpush1.msra.mxu0 0.0
    %126 = vmatprep.subr.mxu0 0.0
    %127 = vmatpush1.msra.mxu0 0.0
    %128 = vmatprep.mubr.f32.mxu0 0.0
    %129 = vmatmul.mubr.f32.gmra.mrb[0].mxu0 %v62
    %v130 = vpop.f32.mrb[0].mxu0
    %v131 = vadd.f32 %v59, %v130
    %v132 = vpop.f32.mrb[0].mxu0
    %133 = vdwg.mxu0
    %vm134 = vcmask 31744
    %135 = vst.msk [vmem:[#allocation2] sm:$0xff] %vm134, %v131
    // Predicated region
    $region10: #{tpu_custom_call.1} parent=1 // pred_check
      _
    $region11: #{tpu_custom_call.1} parent=1 // pred_check_branch
      %137 = sbr.rel (0) target = $region13
    $region12: #{tpu_custom_call.1} parent=1 // pred_region
      %s139 = ssub.s32 128, 32
      %140 = vsyncadd [#allocation3], %s139
      %s141 = sshll.u32 [#allocation2], 4
      %s142 = int_to_ptr.vmem [resolvable:$true] %s141
      %147 = dma.vmem_to_hbm [thread:$0]  %s142, 32, %s2, [#allocation3], 32, 32, 2
    $region13: #{tpu_custom_call.1} parent=1 // pred_fallthru
      _
    // Predicated region
    $region14: #{tpu_custom_call.1} parent=1 // pred_check
      _
    $region15: #{tpu_custom_call.1} parent=1 // pred_check_branch
      %149 = sbr.rel (0) target = $region17
    $region16: #{tpu_custom_call.1} parent=1 // pred_region
      %150 = dma.done [#allocation3], 128
    $region17: #{tpu_custom_call.1} parent=1 // pred_fallthru
      _
    %151 = vsyncpa [#allocation3], 1

</llo_original>
